<compile_context>
chip_gen: v7x
topology: tpu7x:2x2x1
jax: 0.10.0
libtpu: 0.0.40
codegen_flags: <defaults>
</compile_context>

<pallas_src>
import math
import functools

import jax
import jax.numpy as jnp
from jax.experimental import pallas as pl
from jax.experimental.pallas import tpu as pltpu


# ------------------------------------------------------------------ kernels --

def _pe_eval_kernel(x_ref, pe_ref, o_ref):
    # (TB, TL) + (1, TL) broadcast add in the input dtype (no upcast).
    o_ref[...] = x_ref[...] + pe_ref[...]


def _apply_dropout(y, bits_u32, threshold_u32, scale):
    # Integer-space keep test: P(keep) = 1 - p (up to 2^-32 quantization).
    keep = bits_u32 >= jnp.uint32(threshold_u32)
    return jnp.where(keep, y * jnp.asarray(scale, y.dtype), jnp.zeros_like(y))


def _pe_dropout_hw_kernel(seed_ref, x_ref, pe_ref, o_ref, *, threshold, scale):
    # In-kernel TPU hardware PRNG; seed mixed with BOTH grid indices so every
    # (batch, lane) block draws an independent stream.
    pltpu.prng_seed(seed_ref[0], pl.program_id(0), pl.program_id(1))
    bits = pltpu.bitcast(pltpu.prng_random_bits(x_ref.shape), jnp.uint32)
    o_ref[...] = _apply_dropout(x_ref[...] + pe_ref[...], bits, threshold, scale)


def _pe_dropout_bits_kernel(x_ref, pe_ref, bits_ref, o_ref, *, threshold, scale):
    # Portable fallback: random bits streamed from HBM (CPU / interpret mode).
    o_ref[...] = _apply_dropout(x_ref[...] + pe_ref[...], bits_ref[...],
                                threshold, scale)


# ------------------------------------------------------------- param builder --

def build_positional_encoding(dim: int, max_len: int, mode: str = "sincos",
                              key=None) -> jnp.ndarray:
    """Deterministic parameter construction mirroring the PyTorch __init__."""
    assert mode in {"sincos", "params"}
    if mode == "sincos":
        position = jnp.arange(max_len, dtype=jnp.float32)[:, None]          # (L, 1)
        div_term = jnp.exp(jnp.arange(0, dim, 2, dtype=jnp.float32)
                           * (-math.log(10000.0) / dim))                     # (D/2,)
        ang = position * div_term                                            # (L, D/2)
        pe = jnp.zeros((1, max_len, dim), dtype=jnp.float32)
        pe = pe.at[0, :, 0::2].set(jnp.sin(ang))
        pe = pe.at[0, :, 1::2].set(jnp.cos(ang))
        return pe
    key = jax.random.PRNGKey(0) if key is None else key
    return jax.random.normal(key, (1, max_len, dim), dtype=jnp.float32)


def prepare_pe(pe, seq_len: int, dtype):
    """Hoistable: slice pe to the current seq_len and cast to the x dtype once."""
    return pe[:, :seq_len, :].astype(dtype)


# ---------------------------------------------------------------- tile sizing --

_LANE = 128


def _cdiv(a: int, b: int) -> int:
    return (a + b - 1) // b


def _sublane_multiple(dtype) -> int:
    """Rows per packed vreg sublane group for this dtype."""
    return {4: 8, 2: 16, 1: 32}.get(jnp.dtype(dtype).itemsize, 8)


def _vmem_limit_and_budget():
    """Generation-aware VMEM numbers.

    limit  -> pltpu.CompilerParams(vmem_limit_bytes=...), leaves headroom for
              compiler-internal scratch below the physical capacity.
    budget -> cap on the double-buffered pipeline working set used for tiling
              (~70% of the limit).
    v5e/v6e (128 MiB): limit ~96 MiB, budget ~67 MiB.
    v7x     (64 MiB) : limit  48 MiB, budget ~34 MiB.
    """
    cap = None
    try:
        cap = getattr(pltpu.get_tpu_info(), "vmem_capacity_bytes", None)
    except Exception:
        cap = None
    if not cap:
        cap = 64 * 1024 * 1024            # conservative default (v7x per-TC)
    limit = min(int(cap * 0.75), 100 * 1024 * 1024)
    budget = int(limit * 0.7)
    return limit, budget


def _choose_tiles(B: int, L: int, itemsize: int, n_streams: int,
                  budget_bytes: int, sub: int):
    """Pick (TB, TL) blocks for a (B, L) elementwise streaming kernel.

    n_streams = number of double-buffered (TB, TL) streams (x-in, out, [bits]).
    TL is the full L (maximally contiguous DMA) or a multiple of 128.
    TB is the full B (when B <= sub) or a multiple of the sublane packing `sub`.
    Neither is required to divide B / L exactly (grid uses cdiv).
    """
    # pe's (1, TL) double-buffer comes out of the same budget; reserve its
    # worst case (TL <= L) up front.
    budget = max(n_streams * _LANE * itemsize, budget_bytes - 2 * L * itemsize)

    def tb_cap(tl):
        return budget // max(1, n_streams * tl * itemsize)

    # Start with full-L blocks; shrink TL (keeping a multiple of 128) until the
    # minimum useful number of batch rows fits the budget.
    TL = L
    min_rows = B if B <= sub else sub
    while tb_cap(TL) < min_rows and TL > _LANE:
        TL = max(_LANE, (TL // 2 // _LANE) * _LANE)

    if B <= sub:
        TB = B                                     # full batch dim in one block
    else:
        TB = int(min(B, tb_cap(TL)))
        # Multiple of the sublane packing; may slightly exceed the budget in the
        # degenerate huge-row case, vmem_limit_bytes still has headroom.
        TB = max(sub, (TB // sub) * sub)
        # With full-L blocks, keep enough batch steps for pipelining and for
        # splitting work across both v7x TensorCores.
        if _cdiv(L, TL) == 1:
            if B >= 4 * sub:
                TB = min(TB, max(sub, (_cdiv(B, 4) // sub) * sub))
            elif B >= 2 * sub:
                TB = min(TB, max(sub, (_cdiv(B, 2) // sub) * sub))
    return TB, TL


# -------------------------------------------------------------------- forward --

def positional_encoding_forward(x, pe, *, dropout_p: float = 0.1,
                                training: bool = False, seed: int = 0,
                                rng_key=None):
    """x: [B, S, D], pe: [1, max_len, D] -> [B, S, D]."""
    B, S, D = x.shape
    assert pe.shape[1] >= S and pe.shape[2] == D
    assert 0.0 <= float(dropout_p) < 1.0
    dtype = x.dtype

    pe_s = pe if (pe.shape[1] == S and pe.dtype == dtype) else prepare_pe(pe, S, dtype)

    # Flatten (S, D) -> L so the innermost (lane) axis is long and contiguous;
    # pure metadata reshape, no copy.
    L = S * D
    x2 = x.reshape(B, L)
    pe2 = pe_s.reshape(1, L)

    p = float(dropout_p) if training else 0.0
    use_dropout = p > 0.0
    use_hw_prng = use_dropout and jax.default_backend() == "tpu"

    itemsize = jnp.dtype(dtype).itemsize
    n_streams = 4 + (2 if (use_dropout and not use_hw_prng) else 0)

    vmem_limit, vmem_budget = _vmem_limit_and_budget()
    TB, TL = _choose_tiles(B, L, itemsize, n_streams, vmem_budget,
                           _sublane_multiple(dtype))
    grid = (_cdiv(B, TB), _cdiv(L, TL))

    compiler_params = pltpu.CompilerParams(
        dimension_semantics=("parallel", "parallel"),   # disjoint output blocks
        vmem_limit_bytes=vmem_limit,
    )
    out_shape = jax.ShapeDtypeStruct((B, L), dtype)

    x_spec = pl.BlockSpec((TB, TL), lambda b, l: (b, l))
    pe_spec = pl.BlockSpec((1, TL), lambda b, l: (0, l))
    out_spec = pl.BlockSpec((TB, TL), lambda b, l: (b, l))

    if not use_dropout:
        out2 = pl.pallas_call(
            _pe_eval_kernel,
            out_shape=out_shape,
            grid=grid,
            in_specs=[x_spec, pe_spec],
            out_specs=out_spec,
            compiler_params=compiler_params,
        )(x2, pe2)
        return out2.reshape(B, S, D)

    threshold = min(int(round(p * 2.0 ** 32)), 2 ** 32 - 1)
    scale = 1.0 / (1.0 - p)   # cast to input dtype in-kernel (tiny bf16 bias OK)

    if use_hw_prng:
        kernel = functools.partial(_pe_dropout_hw_kernel,
                                   threshold=threshold, scale=scale)
        seed_arr = jnp.array([seed], dtype=jnp.int32)
        grid_spec = pltpu.PrefetchScalarGridSpec(
            num_scalar_prefetch=1,                     # seed lands in SMEM
            grid=grid,
            in_specs=[pl.BlockSpec((TB, TL), lambda b, l, s: (b, l)),
                      pl.BlockSpec((1, TL), lambda b, l, s: (0, l))],
            out_specs=pl.BlockSpec((TB, TL), lambda b, l, s: (b, l)),
        )
        out2 = pl.pallas_call(
            kernel, out_shape=out_shape, grid_spec=grid_spec,
            compiler_params=compiler_params,
        )(seed_arr, x2, pe2)
    else:
        # TODO(synk): pltpu.prng_seed/prng_random_bits have no CPU/interpret
        # lowering; off-TPU we stream host-generated random bits instead.
        key = rng_key if rng_key is not None else jax.random.PRNGKey(seed)
        bits = jax.random.bits(key, (B, L), dtype=jnp.uint32)
        kernel = functools.partial(_pe_dropout_bits_kernel,
                                   threshold=threshold, scale=scale)
        out2 = pl.pallas_call(
            kernel,
            out_shape=out_shape,
            grid=grid,
            in_specs=[x_spec, pe_spec,
                      pl.BlockSpec((TB, TL), lambda b, l: (b, l))],
            out_specs=out_spec,
            compiler_params=compiler_params,
        )(x2, pe2, bits)

    return out2.reshape(B, S, D)


# ----------------------------------------------------------------------- main --

if __name__ == "__main__":
    B, S, D = 2, 8, 32
    MAX_LEN = 16
    P = 0.1

    key = jax.random.PRNGKey(0)
    x = jax.random.normal(key, (B, S, D), dtype=jnp.float32)
    pe = build_positional_encoding(D, MAX_LEN, mode="sincos")
    ref = x + pe[:, :S, :]

    # Eval mode: dropout is identity -> exact match against pure-JAX reference.
    out_eval = positional_encoding_forward(x, pe, dropout_p=P, training=False)
    out_eval = jax.block_until_ready(out_eval)
    assert out_eval.shape == (B, S, D)
    assert jnp.allclose(out_eval, ref, atol=1e-5, rtol=1e-5), "eval-mode mismatch"

    # Training mode: kept elements must equal ref / (1 - p); dropped are 0.
    out_train = positional_encoding_forward(x, pe, dropout_p=P, training=True,
                                            seed=123)
    out_train = jax.block_until_ready(out_train)
    assert out_train.shape == (B, S, D)
    assert bool(jnp.all(jnp.isfinite(out_train)))
    recon = jnp.where(out_train != 0, out_train * (1.0 - P), ref)
    assert jnp.allclose(recon, ref, atol=1e-4, rtol=1e-4), "training-mode mismatch"
    n_dropped = int(jnp.sum(out_train == 0))
    assert 0 < n_dropped < out_train.size, "dropout mask looks degenerate"

    print("KERNEL_OK")
</pallas_src>

<mosaic_0001>
module attributes {stable_mosaic.version = 11 : i64} {
  func.func @_pe_eval_kernel(%arg0: i32, %arg1: i32, %arg2: memref<2x256xf32, #tpu.memory_space<vmem>>, %arg3: memref<1x256xf32, #tpu.memory_space<vmem>>, %arg4: memref<2x256xf32, #tpu.memory_space<vmem>>) attributes {dimension_semantics = [#tpu.dimension_semantics<parallel>, #tpu.dimension_semantics<parallel>], iteration_bounds = array<i64: 1, 1>, scalar_prefetch = 0 : i64, scratch_operands = 0 : i64, tpu.core_type = #tpu.core_type<tc>, window_params = [{transform_indices = @transform_0, window_bounds = array<i64: 2, 256>}, {transform_indices = @transform_1, window_bounds = array<i64: 1, 256>}, {transform_indices = @transform_2, window_bounds = array<i64: 2, 256>}]} {
    %c0 = arith.constant 0 : index
    %c0_0 = arith.constant 0 : index
    %0 = vector.load %arg2[%c0, %c0_0] : memref<2x256xf32, #tpu.memory_space<vmem>>, vector<2x256xf32>
    %c0_1 = arith.constant 0 : index
    %c0_2 = arith.constant 0 : index
    %1 = vector.load %arg3[%c0_1, %c0_2] : memref<1x256xf32, #tpu.memory_space<vmem>>, vector<1x256xf32>
    %2 = vector.broadcast %1 : vector<1x256xf32> to vector<2x256xf32>
    %3 = arith.addf %0, %2 : vector<2x256xf32>
    %c0_3 = arith.constant 0 : index
    %c0_4 = arith.constant 0 : index
    %4 = vector.load %arg4[%c0_3, %c0_4] : memref<2x256xf32, #tpu.memory_space<vmem>>, vector<2x256xf32>
    tpu.vector_store %arg4[%c0_3, %c0_4], %3 {strides = array<i32>} : memref<2x256xf32, #tpu.memory_space<vmem>>, vector<2x256xf32>,
    return
  }
  func.func @transform_0(%arg0: i32, %arg1: i32) -> (i32, i32) {
    %c0_i32 = arith.constant 0 : i32
    return %arg0, %arg1 : i32, i32
  }
  func.func @transform_1(%arg0: i32, %arg1: i32) -> (i32, i32) {
    %c0_i32 = arith.constant 0 : i32
    %c0_i32_0 = arith.constant 0 : i32
    return %c0_i32, %arg1 : i32, i32
  }
  func.func @transform_2(%arg0: i32, %arg1: i32) -> (i32, i32) {
    %c0_i32 = arith.constant 0 : i32
    return %arg0, %arg1 : i32, i32
  }
}

</mosaic_0001>

<llo_original>
// kernel: tpu_custom_call.1
$region0: #{tpu_custom_call.1}
  #allocation0 [shape = 'u32[]', space=smem, size = 0x4, offset = 0x4, fixed_abs, tag = 'smem constant byte address 0x4 - core index']
  #allocation1 [shape = 'u32[144,128]{1,0:T(1,128)}', space=vmem, size = 0x12000, scoped, tag = 'internal scratch']
  %s0 = inlined_call_operand.hbm [shape: f32[2,256], index: 0, kind: input, shape index: {}]
  %s1 = inlined_call_operand.vmem [shape: f32[1,256], index: 1, kind: input, shape index: {}]
  %s2 = inlined_call_operand.hbm [shape: f32[2,256], index: 2, kind: output, shape index: {}]
  %s3 = sld [smem:[#allocation0]]
  $region22: #{tpu_custom_call.1} parent=0
    _
  %s5 = ssub.s32 1, %s3
  %s6 = scalar_select 0, %s5, %s3
  $region1: #{tpu_custom_call.1} parent=0
    #allocation2 [shape = 'u8[2048]{0}', space=vmem, size = 0x800, scoped, tag = 'input window, operand 0, single buffered']
    #allocation3 [shape = 's32[1]{0}', space=sflag, size = 0x4, scoped, tag = 'scoped memory for tpu_custom_call.1']
    #allocation4 [shape = 's32[1]{0}', space=sflag, size = 0x4, scoped, tag = 'scoped memory for tpu_custom_call.1']
    #allocation5 [shape = 'u8[2048]{0}', space=vmem, size = 0x800, scoped, tag = 'output window, operand 0, single buffered']
    %7 = vsyncpa [#allocation3], 0
    %8 = vsyncpa [#allocation4], 0
    // Predicated region
    $region2: #{tpu_custom_call.1} parent=1 // pred_check
      _
    $region3: #{tpu_custom_call.1} parent=1 // pred_check_branch
      %10 = sbr.rel (0) target = $region5
    $region4: #{tpu_custom_call.1} parent=1 // pred_region
      %s12 = ssub.s32 64, 64
      %13 = vsyncadd [#allocation3], %s12
      %s15 = sshll.u32 [#allocation2], 4
      %s16 = int_to_ptr.vmem [resolvable:$true] %s15
      %18 = dma.hbm_to_vmem [thread:$0]  %s0, 64, %s16, [#allocation3]
    $region5: #{tpu_custom_call.1} parent=1 // pred_fallthru
      _
    // Predicated region
    $region6: #{tpu_custom_call.1} parent=1 // pred_check
      _
    $region7: #{tpu_custom_call.1} parent=1 // pred_check_branch
      %20 = sbr.rel (0) target = $region9
    $region8: #{tpu_custom_call.1} parent=1 // pred_region
      _
    $region9: #{tpu_custom_call.1} parent=1 // pred_fallthru
      _
    // Predicated region
    $region10: #{tpu_custom_call.1} parent=1 // pred_check
      _
    $region11: #{tpu_custom_call.1} parent=1 // pred_check_branch
      %22 = sbr.rel (0) target = $region13
    $region12: #{tpu_custom_call.1} parent=1 // pred_region
      %23 = dma.done [#allocation3], 64
    $region13: #{tpu_custom_call.1} parent=1 // pred_fallthru
      _
    %v24 = vld [vmem:[#allocation2] sm:$0xf]
    %v25 = vld [vmem:[%s1] sm:$0x3]
    %v27 = vlaneseq
    %v28 = vshrl.u32 %v27, 7
    %v29 = vsub.s32 0, %v28
    %v30 = vrot.slane %v25, %v29
    %v31 = vlaneseq
    %v32 = vshrl.u32 %v31, 7
    %v33 = vsub.s32 1, %v32
    %v34 = vrot.slane %v25, %v33
    %v35 = vcombine.low %v30, %v34
    %v37 = vunpack.c.l.s4 1983009808
    %v38 = vunpack.c.0.s8 %v37
    %v39 = vlaneseq
    %v40 = vshrl.u32 %v39, 7
    %v41 = vsub.s32 %v38, %v40
    %v42 = vrot.slane %v35, %v41
    %v44 = vadd.f32 %v24, %v42
    %45 = vst [vmem:[#allocation5] sm:$0xf] %v44
    // Predicated region
    $region14: #{tpu_custom_call.1} parent=1 // pred_check
      _
    $region15: #{tpu_custom_call.1} parent=1 // pred_check_branch
      %47 = sbr.rel (0) target = $region17
    $region16: #{tpu_custom_call.1} parent=1 // pred_region
      %s49 = ssub.s32 64, 64
      %50 = vsyncadd [#allocation4], %s49
      %s52 = sshll.u32 [#allocation5], 4
      %s53 = int_to_ptr.vmem [resolvable:$true] %s52
      %55 = dma.vmem_to_hbm [thread:$0]  %s53, 64, %s2, [#allocation4]
    $region17: #{tpu_custom_call.1} parent=1 // pred_fallthru
      _
    // Predicated region
    $region18: #{tpu_custom_call.1} parent=1 // pred_check
      _
    $region19: #{tpu_custom_call.1} parent=1 // pred_check_branch
      %57 = sbr.rel (0) target = $region21
    $region20: #{tpu_custom_call.1} parent=1 // pred_region
      %58 = dma.done [#allocation4], 64
    $region21: #{tpu_custom_call.1} parent=1 // pred_fallthru
      _
    %59 = vsyncpa [#allocation3], 1
    %60 = vsyncpa [#allocation4], 1

</llo_original>
